<compile_context>
chip_gen: v5e
topology: v5e:2x2
jax: 0.10.0
libtpu: 0.0.40
codegen_flags: <defaults>
</compile_context>

<pallas_src>
import functools

import jax
import jax.numpy as jnp
from jax.experimental import pallas as pl
from jax.experimental.pallas import tpu as pltpu


def _full_rel_pos_kernel(qh_ref, qw_ref, ph_ref, pw_ref, attn_ref, o_ref):
    """One grid step == one query row index qh (covers all of B, qw, G)."""
    # qh_ref, qw_ref: (B, w, G, c)   halves of q's (n c) channel split
    # ph_ref:         (c, K)         h-axis table for this qh (NN layout)
    # pw_ref:         (w, c, K)      w-axis table (resident across steps)
    # attn_ref/o_ref: (B, w, G, K)
    w_sz, c_sz, k_sz = pw_ref.shape
    n_batch = qh_ref.shape[0]

    pw = pw_ref[...]
    # The h-table is shared by every qw in this step: broadcast it once across
    # the leading (w) batch dim, hoisted out of the batch loop (JAX does not
    # CSE broadcast_in_dim).
    ph_b = jnp.broadcast_to(ph_ref[...], (w_sz, c_sz, k_sz))

    for b in range(n_batch):                       # static unroll; B is small
        bias = jnp.einsum("wgc,wck->wgk", qh_ref[b], ph_b,
                          preferred_element_type=jnp.float32)
        bias = bias + jnp.einsum("wgc,wck->wgk", qw_ref[b], pw,
                                 preferred_element_type=jnp.float32)
        o_ref[b] = (attn_ref[b].astype(jnp.float32) + bias).astype(o_ref.dtype)


def _build_rel_tables(rel_emb_h, rel_emb_w, h, w, dtype):
    """Factorized position tables in NN (q, c, K) layout, expanded along the
    flattened key axis K = kh*w + kw.  One-time O(hw*(h+w)*c) cost; never
    materializes the O((hw)^2 * dim) fused table."""
    idx_h = jnp.arange(h)[None, :] - jnp.arange(h)[:, None] + (h - 1)   # (h, h)
    idx_w = jnp.arange(w)[None, :] - jnp.arange(w)[:, None] + (w - 1)   # (w, w)
    abs_pos_h = rel_emb_h[idx_h]                    # (qh, kh, c)
    abs_pos_w = rel_emb_w[idx_w]                    # (qw, kw, c)
    # ph[qh, c, k] = abs_pos_h[qh, k // w, c]; pw[qw, c, k] = abs_pos_w[qw, k % w, c]
    ph = jnp.repeat(jnp.swapaxes(abs_pos_h, 1, 2), w, axis=2)           # (h, c, h*w)
    pw = jnp.tile(jnp.swapaxes(abs_pos_w, 1, 2), (1, 1, h))             # (w, c, h*w)
    return ph.astype(dtype), pw.astype(dtype)


@functools.partial(jax.jit, static_argnames=("h", "w", "compute_dtype"))
def full_rel_pos(q, attn, rel_emb_h, rel_emb_w, *, h, w, compute_dtype=None):
    """q: (B, h*w, G, dim); attn: (B, h*w, G, h*w); rel_emb_*: (2h-1, dim//2)."""
    B, Q, G, D = q.shape
    K = attn.shape[-1]
    c = D // 2
    assert Q == h * w and K == h * w and D % 2 == 0
    # On v6e/v7x pass compute_dtype=jnp.bfloat16: bf16 MXU operands, f32 accum,
    # f32 attn add (no bf16 VPU work, so also safe on v5e).
    cdt = q.dtype if compute_dtype is None else compute_dtype

    ph, pw = _build_rel_tables(rel_emb_h, rel_emb_w, h, w, cdt)

    # Free metadata reshapes: split the flattened query axis into (qh, qw) and
    # q's (n c) channel axis into its h/w halves.
    q5 = q.reshape(B, h, w, G, D).astype(cdt)
    q_h = q5[..., :c]                               # (B, h, w, G, c)
    q_w = q5[..., c:]                               # (B, h, w, G, c)
    attn5 = attn.reshape(B, h, w, G, K)

    out5 = pl.pallas_call(
        _full_rel_pos_kernel,
        out_shape=jax.ShapeDtypeStruct((B, h, w, G, K), attn.dtype),
        grid_spec=pltpu.PrefetchScalarGridSpec(
            num_scalar_prefetch=0,
            grid=(h,),                              # parallel over query rows qh
            in_specs=[
                pl.BlockSpec((B, None, w, G, c), lambda i: (0, i, 0, 0, 0)),  # q_h
                pl.BlockSpec((B, None, w, G, c), lambda i: (0, i, 0, 0, 0)),  # q_w
                pl.BlockSpec((None, c, K), lambda i: (i, 0, 0)),              # ph row qh
                pl.BlockSpec((w, c, K), lambda i: (0, 0, 0)),                 # pw resident
                pl.BlockSpec((B, None, w, G, K), lambda i: (0, i, 0, 0, 0)),  # attn
            ],
            out_specs=pl.BlockSpec((B, None, w, G, K), lambda i: (0, i, 0, 0, 0)),
        ),
        # attn is the largest tensor and has the same shape/dtype as the
        # output: update it in place instead of allocating a second HBM buffer.
        input_output_aliases={4: 0},
        compiler_params=pltpu.CompilerParams(
            dimension_semantics=("parallel",)),
    )(q_h, q_w, ph, pw, attn5)

    return out5.reshape(B, Q, G, K)


def reference(q, attn, rel_emb_h, rel_emb_w, h, w):
    """Pure-JAX transcription of FullRelPos.forward."""
    B, Q, G, D = q.shape
    c = D // 2
    idx_h = jnp.arange(h)[None, :] - jnp.arange(h)[:, None] + (h - 1)
    idx_w = jnp.arange(w)[None, :] - jnp.arange(w)[:, None] + (w - 1)
    abs_pos_h = rel_emb_h[idx_h]                    # (h, h, c)
    abs_pos_w = rel_emb_w[idx_w]                    # (w, w, c)
    qr = q.reshape(B, h, w, G, 2, c)
    logits_h = jnp.einsum("bhwgc,hkc->bhwgk", qr[..., 0, :], abs_pos_h)
    logits_w = jnp.einsum("bhwgc,wkc->bhwgk", qr[..., 1, :], abs_pos_w)
    attn5 = attn.reshape(B, h * w, G, h, w)
    out = (attn5
           + logits_h.reshape(B, h * w, G, h, 1)
           + logits_w.reshape(B, h * w, G, 1, w))
    return out.reshape(B, h * w, G, h * w)


if __name__ == "__main__":
    # Small shapes consistent with the module: B=2, h=w=4 (Q=K=16), G=2, dim=32.
    B, h, w, G, dim = 2, 4, 4, 2, 32
    Q = K = h * w
    c = dim // 2

    key = jax.random.PRNGKey(0)
    kq, ka, keh, kew = jax.random.split(key, 4)
    q = jax.random.normal(kq, (B, Q, G, dim), dtype=jnp.float32)
    attn = jax.random.normal(ka, (B, Q, G, K), dtype=jnp.float32)
    # trunc_normal_(std=0.02) init approximated with a plain normal (synthetic).
    rel_emb_h = 0.02 * jax.random.normal(keh, (2 * h - 1, c), dtype=jnp.float32)
    rel_emb_w = 0.02 * jax.random.normal(kew, (2 * w - 1, c), dtype=jnp.float32)

    out = full_rel_pos(q, attn, rel_emb_h, rel_emb_w, h=h, w=w)
    out = jax.block_until_ready(out)

    ref = reference(q, attn, rel_emb_h, rel_emb_w, h, w)
    assert out.shape == (B, Q, G, K)
    err = float(jnp.max(jnp.abs(out - ref)))
    assert jnp.allclose(out, ref, atol=1e-4, rtol=1e-4), f"max abs err = {err}"

    print("KERNEL_OK")
</pallas_src>

<mosaic_0001>
module attributes {stable_mosaic.version = 11 : i64} {
  func.func @_full_rel_pos_kernel(%arg0: i32, %arg1: memref<2x1x4x2x16xf32, #tpu.memory_space<vmem>>, %arg2: memref<2x1x4x2x16xf32, #tpu.memory_space<vmem>>, %arg3: memref<1x16x16xf32, #tpu.memory_space<vmem>>, %arg4: memref<4x16x16xf32, #tpu.memory_space<vmem>>, %arg5: memref<2x1x4x2x16xf32, #tpu.memory_space<vmem>>, %arg6: memref<2x1x4x2x16xf32, #tpu.memory_space<vmem>>) attributes {dimension_semantics = [#tpu.dimension_semantics<parallel>], iteration_bounds = array<i64: 4>, scalar_prefetch = 0 : i64, scratch_operands = 0 : i64, tpu.core_type = #tpu.core_type<tc>, window_params = [{transform_indices = @transform_0, window_bounds = array<i64: 2, 1, 4, 2, 16>}, {transform_indices = @transform_1, window_bounds = array<i64: 2, 1, 4, 2, 16>}, {transform_indices = @transform_2, window_bounds = array<i64: 1, 16, 16>}, {pipeline_mode = #tpu.pipeline_mode<synchronous>, transform_indices = @transform_3, window_bounds = array<i64: 4, 16, 16>}, {transform_indices = @transform_4, window_bounds = array<i64: 2, 1, 4, 2, 16>}, {transform_indices = @transform_5, window_bounds = array<i64: 2, 1, 4, 2, 16>}]} {
    %c0 = arith.constant 0 : index
    %c0_0 = arith.constant 0 : index
    %c0_1 = arith.constant 0 : index
    %0 = vector.load %arg4[%c0, %c0_0, %c0_1] : memref<4x16x16xf32, #tpu.memory_space<vmem>>, vector<4x16x16xf32>
    %c0_2 = arith.constant 0 : index
    %c0_3 = arith.constant 0 : index
    %c0_4 = arith.constant 0 : index
    %1 = vector.load %arg3[%c0_2, %c0_3, %c0_4] : memref<1x16x16xf32, #tpu.memory_space<vmem>>, vector<1x16x16xf32>
    %2 = vector.shape_cast %1 : vector<1x16x16xf32> to vector<16x16xf32>
    %3 = vector.shape_cast %2 : vector<16x16xf32> to vector<1x16x16xf32>
    %4 = vector.broadcast %3 : vector<1x16x16xf32> to vector<4x16x16xf32>
    %c0_5 = arith.constant 0 : index
    %c0_6 = arith.constant 0 : index
    %c0_7 = arith.constant 0 : index
    %c0_8 = arith.constant 0 : index
    %c0_9 = arith.constant 0 : index
    %5 = vector.load %arg1[%c0_5, %c0_6, %c0_7, %c0_8, %c0_9] : memref<2x1x4x2x16xf32, #tpu.memory_space<vmem>>, vector<1x1x4x2x16xf32>
    %6 = vector.shape_cast %5 : vector<1x1x4x2x16xf32> to vector<4x2x16xf32>
    "tpu.trace_start"() <{level = 10 : i32, message = "wgc,wck->wgk"}> : () -> ()
    %cst = arith.constant dense<0.000000e+00> : vector<4x2x16xf32>
    %7 = tpu.matmul %6, %4, %cst {dimension_numbers = #tpu.dot_dimension_numbers<[2], [1], [1], [2], [0, 0, 0, 1, 1, 2], [0], [0]>} : vector<4x2x16xf32>, vector<4x16x16xf32>, vector<4x2x16xf32> -> vector<4x2x16xf32>
    "tpu.trace_stop"() : () -> ()
    %c0_10 = arith.constant 0 : index
    %c0_11 = arith.constant 0 : index
    %c0_12 = arith.constant 0 : index
    %c0_13 = arith.constant 0 : index
    %c0_14 = arith.constant 0 : index
    %8 = vector.load %arg2[%c0_10, %c0_11, %c0_12, %c0_13, %c0_14] : memref<2x1x4x2x16xf32, #tpu.memory_space<vmem>>, vector<1x1x4x2x16xf32>
    %9 = vector.shape_cast %8 : vector<1x1x4x2x16xf32> to vector<4x2x16xf32>
    "tpu.trace_start"() <{level = 10 : i32, message = "wgc,wck->wgk"}> : () -> ()
    %cst_15 = arith.constant dense<0.000000e+00> : vector<4x2x16xf32>
    %10 = tpu.matmul %9, %0, %cst_15 {dimension_numbers = #tpu.dot_dimension_numbers<[2], [1], [1], [2], [0, 0, 0, 1, 1, 2], [0], [0]>} : vector<4x2x16xf32>, vector<4x16x16xf32>, vector<4x2x16xf32> -> vector<4x2x16xf32>
    "tpu.trace_stop"() : () -> ()
    %11 = arith.addf %7, %10 : vector<4x2x16xf32>
    %c0_16 = arith.constant 0 : index
    %c0_17 = arith.constant 0 : index
    %c0_18 = arith.constant 0 : index
    %c0_19 = arith.constant 0 : index
    %c0_20 = arith.constant 0 : index
    %12 = vector.load %arg5[%c0_16, %c0_17, %c0_18, %c0_19, %c0_20] : memref<2x1x4x2x16xf32, #tpu.memory_space<vmem>>, vector<1x1x4x2x16xf32>
    %13 = vector.shape_cast %12 : vector<1x1x4x2x16xf32> to vector<4x2x16xf32>
    %14 = arith.addf %13, %11 : vector<4x2x16xf32>
    %c0_21 = arith.constant 0 : index
    %c0_22 = arith.constant 0 : index
    %c0_23 = arith.constant 0 : index
    %c0_24 = arith.constant 0 : index
    %c0_25 = arith.constant 0 : index
    %15 = vector.load %arg6[%c0_21, %c0_22, %c0_23, %c0_24, %c0_25] : memref<2x1x4x2x16xf32, #tpu.memory_space<vmem>>, vector<1x1x4x2x16xf32>
    %16 = vector.shape_cast %15 : vector<1x1x4x2x16xf32> to vector<4x2x16xf32>
    %17 = vector.shape_cast %14 : vector<4x2x16xf32> to vector<1x1x4x2x16xf32>
    tpu.vector_store %arg6[%c0_21, %c0_22, %c0_23, %c0_24, %c0_25], %17 {strides = array<i32>} : memref<2x1x4x2x16xf32, #tpu.memory_space<vmem>>, vector<1x1x4x2x16xf32>,
    %c1 = arith.constant 1 : index
    %c0_26 = arith.constant 0 : index
    %c0_27 = arith.constant 0 : index
    %c0_28 = arith.constant 0 : index
    %c0_29 = arith.constant 0 : index
    %18 = vector.load %arg1[%c1, %c0_26, %c0_27, %c0_28, %c0_29] : memref<2x1x4x2x16xf32, #tpu.memory_space<vmem>>, vector<1x1x4x2x16xf32>
    %19 = vector.shape_cast %18 : vector<1x1x4x2x16xf32> to vector<4x2x16xf32>
    "tpu.trace_start"() <{level = 10 : i32, message = "wgc,wck->wgk"}> : () -> ()
    %cst_30 = arith.constant dense<0.000000e+00> : vector<4x2x16xf32>
    %20 = tpu.matmul %19, %4, %cst_30 {dimension_numbers = #tpu.dot_dimension_numbers<[2], [1], [1], [2], [0, 0, 0, 1, 1, 2], [0], [0]>} : vector<4x2x16xf32>, vector<4x16x16xf32>, vector<4x2x16xf32> -> vector<4x2x16xf32>
    "tpu.trace_stop"() : () -> ()
    %c1_31 = arith.constant 1 : index
    %c0_32 = arith.constant 0 : index
    %c0_33 = arith.constant 0 : index
    %c0_34 = arith.constant 0 : index
    %c0_35 = arith.constant 0 : index
    %21 = vector.load %arg2[%c1_31, %c0_32, %c0_33, %c0_34, %c0_35] : memref<2x1x4x2x16xf32, #tpu.memory_space<vmem>>, vector<1x1x4x2x16xf32>
    %22 = vector.shape_cast %21 : vector<1x1x4x2x16xf32> to vector<4x2x16xf32>
    "tpu.trace_start"() <{level = 10 : i32, message = "wgc,wck->wgk"}> : () -> ()
    %cst_36 = arith.constant dense<0.000000e+00> : vector<4x2x16xf32>
    %23 = tpu.matmul %22, %0, %cst_36 {dimension_numbers = #tpu.dot_dimension_numbers<[2], [1], [1], [2], [0, 0, 0, 1, 1, 2], [0], [0]>} : vector<4x2x16xf32>, vector<4x16x16xf32>, vector<4x2x16xf32> -> vector<4x2x16xf32>
    "tpu.trace_stop"() : () -> ()
    %24 = arith.addf %20, %23 : vector<4x2x16xf32>
    %c1_37 = arith.constant 1 : index
    %c0_38 = arith.constant 0 : index
    %c0_39 = arith.constant 0 : index
    %c0_40 = arith.constant 0 : index
    %c0_41 = arith.constant 0 : index
    %25 = vector.load %arg5[%c1_37, %c0_38, %c0_39, %c0_40, %c0_41] : memref<2x1x4x2x16xf32, #tpu.memory_space<vmem>>, vector<1x1x4x2x16xf32>
    %26 = vector.shape_cast %25 : vector<1x1x4x2x16xf32> to vector<4x2x16xf32>
    %27 = arith.addf %26, %24 : vector<4x2x16xf32>
    %c1_42 = arith.constant 1 : index
    %c0_43 = arith.constant 0 : index
    %c0_44 = arith.constant 0 : index
    %c0_45 = arith.constant 0 : index
    %c0_46 = arith.constant 0 : index
    %28 = vector.load %arg6[%c1_42, %c0_43, %c0_44, %c0_45, %c0_46] : memref<2x1x4x2x16xf32, #tpu.memory_space<vmem>>, vector<1x1x4x2x16xf32>
    %29 = vector.shape_cast %28 : vector<1x1x4x2x16xf32> to vector<4x2x16xf32>
    %30 = vector.shape_cast %27 : vector<4x2x16xf32> to vector<1x1x4x2x16xf32>
    tpu.vector_store %arg6[%c1_42, %c0_43, %c0_44, %c0_45, %c0_46], %30 {strides = array<i32>} : memref<2x1x4x2x16xf32, #tpu.memory_space<vmem>>, vector<1x1x4x2x16xf32>,
    return
  }
  func.func @transform_0(%arg0: i32) -> (i32, i32, i32, i32, i32) {
    %c0_i32 = arith.constant 0 : i32
    %c0_i32_0 = arith.constant 0 : i32
    %c0_i32_1 = arith.constant 0 : i32
    %c0_i32_2 = arith.constant 0 : i32
    %c0_i32_3 = arith.constant 0 : i32
    return %c0_i32, %arg0, %c0_i32_0, %c0_i32_1, %c0_i32_2 : i32, i32, i32, i32, i32
  }
  func.func @transform_1(%arg0: i32) -> (i32, i32, i32, i32, i32) {
    %c0_i32 = arith.constant 0 : i32
    %c0_i32_0 = arith.constant 0 : i32
    %c0_i32_1 = arith.constant 0 : i32
    %c0_i32_2 = arith.constant 0 : i32
    %c0_i32_3 = arith.constant 0 : i32
    return %c0_i32, %arg0, %c0_i32_0, %c0_i32_1, %c0_i32_2 : i32, i32, i32, i32, i32
  }
  func.func @transform_2(%arg0: i32) -> (i32, i32, i32) {
    %c0_i32 = arith.constant 0 : i32
    %c0_i32_0 = arith.constant 0 : i32
    %c0_i32_1 = arith.constant 0 : i32
    return %arg0, %c0_i32, %c0_i32_0 : i32, i32, i32
  }
  func.func @transform_3(%arg0: i32) -> (i32, i32, i32) {
    %c0_i32 = arith.constant 0 : i32
    %c0_i32_0 = arith.constant 0 : i32
    %c0_i32_1 = arith.constant 0 : i32
    %c0_i32_2 = arith.constant 0 : i32
    return %c0_i32, %c0_i32_0, %c0_i32_1 : i32, i32, i32
  }
  func.func @transform_4(%arg0: i32) -> (i32, i32, i32, i32, i32) {
    %c0_i32 = arith.constant 0 : i32
    %c0_i32_0 = arith.constant 0 : i32
    %c0_i32_1 = arith.constant 0 : i32
    %c0_i32_2 = arith.constant 0 : i32
    %c0_i32_3 = arith.constant 0 : i32
    return %c0_i32, %arg0, %c0_i32_0, %c0_i32_1, %c0_i32_2 : i32, i32, i32, i32, i32
  }
  func.func @transform_5(%arg0: i32) -> (i32, i32, i32, i32, i32) {
    %c0_i32 = arith.constant 0 : i32
    %c0_i32_0 = arith.constant 0 : i32
    %c0_i32_1 = arith.constant 0 : i32
    %c0_i32_2 = arith.constant 0 : i32
    %c0_i32_3 = arith.constant 0 : i32
    return %c0_i32, %arg0, %c0_i32_0, %c0_i32_1, %c0_i32_2 : i32, i32, i32, i32, i32
  }
}

</mosaic_0001>

<llo_original>
// kernel: full_rel_pos.1
$region0: #{full_rel_pos.1}
  #allocation0 [shape = 'u32[]', space=smem, size = 0x4, offset = 0x4, fixed_abs, tag = 'smem constant byte address 0x4 - core index']
  #allocation1 [shape = 'u32[72,128]{1,0:T(1,128)}', space=vmem, size = 0x9000, scoped, tag = 'internal scratch']
  %s0 = inlined_call_operand.vmem [shape: f32[2,4,4,2,16], index: 0, kind: input, shape index: {}]
  %s1 = inlined_call_operand.vmem [shape: f32[2,4,4,2,16], index: 1, kind: input, shape index: {}]
  %s2 = inlined_call_operand.vmem [shape: f32[4,16,16], index: 2, kind: input, shape index: {}]
  %s3 = inlined_call_operand.vmem [shape: f32[4,16,16], index: 3, kind: input, shape index: {}]
  %s4 = inlined_call_operand.vmem [shape: f32[2,4,4,2,16], index: 4, kind: input, shape index: {}, may-alias: {4,5}]
  %s5 = inlined_call_operand.vmem [shape: f32[2,4,4,2,16], index: 5, kind: output, shape index: {}, may-alias: {4,5}]
  %s6 = sld [smem:[#allocation0]]
  $region213: #{full_rel_pos.1} parent=0
    _
  %s8 = ssub.s32 1, %s6
  %s9 = scalar_select 0, %s8, %s6
  $region1: #{full_rel_pos.1} parent=0
    #allocation2 [shape = 'u8[16384]{0}', space=vmem, size = 0x4000, scoped, tag = 'input window, operand 0']
    #allocation3 [shape = 'u8[16384]{0}', space=vmem, size = 0x4000, scoped, tag = 'input window, operand 1']
    #allocation4 [shape = 'u8[16384]{0}', space=vmem, size = 0x4000, scoped, tag = 'input window, operand 4']
    #allocation5 [shape = 'u8[16384]{0}', space=vmem, size = 0x4000, scoped, tag = 'output window, operand 0']
    loop: start=0, step=1, limit=6
    $region2: #{full_rel_pos.1} parent=1 // loop_pre_header
      _
    $region3: #{full_rel_pos.1} parent=1 // loop_header
      %s11 = sphi 0, %s15
      %p12 = scmp.ge.s32.totalorder %s11, 6
      %s21 = sphi 0, %s23
      %s24 = sphi 0, %s21
      %s25 = sphi 0, %s24
      %s41 = sphi 0, %s25
      %s47 = sphi 0, %s49
      %s50 = sphi 0, %s47
      %s51 = sphi 0, %s50
      %s67 = sphi 0, %s51
      %s73 = sphi 0, %s75
      %s76 = sphi 0, %s73
      %s77 = sphi 0, %s76
      %s93 = sphi 0, %s77
      %s97 = sphi 0, %s97
      %s99 = sphi 0, %s97
      %s100 = sphi 0, %s99
      %s114 = sphi 0, %s100
      %s120 = sphi 0, %s122
      %s123 = sphi 0, %s120
      %s124 = sphi 0, %s123
      %s140 = sphi 0, %s124
      %s146 = sphi 0, %s148
      %s149 = sphi 0, %s146
      %s150 = sphi 0, %s149
      %s166 = sphi 0, %s150
    $region4: #{full_rel_pos.1} parent=1 // loop_header_branch
      %14 = sbr.rel (%p12) target = $region8
    $region5: #{full_rel_pos.1} parent=1 // loop_body
      %s16 = ssub.s32 %s11, 1
      %s17 = ssub.s32 %s11, 2
      %s18 = sadd.s32 %s11, 1
      %s19 = ssub.s32 %s11, %s18
      %p20 = scmp.eq.s32.totalorder %s19, 0
      %s22 = sadd.s32 %s21, 1
      %s23 = scalar_select %p20, %s21, %s22
      %p26 = pneg %p20
      %p27 = scmp.eq.s32.totalorder %s11, 3
      %p28 = por %p26, %p27
      %p29 = scmp.ne.s32.totalorder %s21, %s24
      %p30 = scmp.eq.s32.totalorder %s11, 0
      %p31 = por %p29, %p30
      %p32 = scmp.ne.s32.totalorder %s21, %s24
      %p33 = scmp.eq.s32.totalorder %s16, 3
      %p34 = por %p32, %p33
      %p35 = scmp.ne.s32.totalorder %s24, %s25
      %p36 = scmp.eq.s32.totalorder %s16, 0
      %p37 = por %p35, %p36
      %p38 = scmp.ne.s32.totalorder %s24, %s25
      %p39 = scmp.eq.s32.totalorder %s17, 3
      %p40 = por %p38, %p39
      %p42 = scmp.ne.s32.totalorder %s25, %s41
      %p43 = scmp.eq.s32.totalorder %s17, 0
      %p44 = por %p42, %p43
      %s45 = ssub.s32 %s11, %s18
      %p46 = scmp.eq.s32.totalorder %s45, 0
      %s48 = sadd.s32 %s47, 1
      %s49 = scalar_select %p46, %s47, %s48
      %p52 = pneg %p46
      %p53 = scmp.eq.s32.totalorder %s11, 3
      %p54 = por %p52, %p53
      %p55 = scmp.ne.s32.totalorder %s47, %s50
      %p56 = scmp.eq.s32.totalorder %s11, 0
      %p57 = por %p55, %p56
      %p58 = scmp.ne.s32.totalorder %s47, %s50
      %p59 = scmp.eq.s32.totalorder %s16, 3
      %p60 = por %p58, %p59
      %p61 = scmp.ne.s32.totalorder %s50, %s51
      %p62 = scmp.eq.s32.totalorder %s16, 0
      %p63 = por %p61, %p62
      %p64 = scmp.ne.s32.totalorder %s50, %s51
      %p65 = scmp.eq.s32.totalorder %s17, 3
      %p66 = por %p64, %p65
      %p68 = scmp.ne.s32.totalorder %s51, %s67
      %p69 = scmp.eq.s32.totalorder %s17, 0
      %p70 = por %p68, %p69
      %s71 = ssub.s32 %s11, %s18
      %p72 = scmp.eq.s32.totalorder %s71, 0
      %s74 = sadd.s32 %s73, 1
      %s75 = scalar_select %p72, %s73, %s74
      %p78 = pneg %p72
      %p79 = scmp.eq.s32.totalorder %s11, 3
      %p80 = por %p78, %p79
      %p81 = scmp.ne.s32.totalorder %s73, %s76
      %p82 = scmp.eq.s32.totalorder %s11, 0
      %p83 = por %p81, %p82
      %p84 = scmp.ne.s32.totalorder %s73, %s76
      %p85 = scmp.eq.s32.totalorder %s16, 3
      %p86 = por %p84, %p85
      %p87 = scmp.ne.s32.totalorder %s76, %s77
      %p88 = scmp.eq.s32.totalorder %s16, 0
      %p89 = por %p87, %p88
      %p90 = scmp.ne.s32.totalorder %s76, %s77
      %p91 = scmp.eq.s32.totalorder %s17, 3
      %p92 = por %p90, %p91
      %p94 = scmp.ne.s32.totalorder %s77, %s93
      %p95 = scmp.eq.s32.totalorder %s17, 0
      %p96 = por %p94, %p95
      %s98 = sadd.s32 %s97, 1
      %p101 = scmp.eq.s32.totalorder %s11, 3
      %p102 = scmp.ne.s32.totalorder %s97, %s99
      %p103 = scmp.eq.s32.totalorder %s11, 0
      %p104 = por %p102, %p103
      %p105 = scmp.ne.s32.totalorder %s97, %s99
      %p106 = scmp.eq.s32.totalorder %s16, 3
      %p107 = por %p105, %p106
      %p108 = scmp.ne.s32.totalorder %s99, %s100
      %p109 = scmp.eq.s32.totalorder %s16, 0
      %p110 = por %p108, %p109
      %p111 = scmp.ne.s32.totalorder %s99, %s100
      %p112 = scmp.eq.s32.totalorder %s17, 3
      %p113 = por %p111, %p112
      %p115 = scmp.ne.s32.totalorder %s100, %s114
      %p116 = scmp.eq.s32.totalorder %s17, 0
      %p117 = por %p115, %p116
      %s118 = ssub.s32 %s11, %s18
      %p119 = scmp.eq.s32.totalorder %s118, 0
      %s121 = sadd.s32 %s120, 1
      %s122 = scalar_select %p119, %s120, %s121
      %p125 = pneg %p119
      %p126 = scmp.eq.s32.totalorder %s11, 3
      %p127 = por %p125, %p126
      %p128 = scmp.ne.s32.totalorder %s120, %s123
      %p129 = scmp.eq.s32.totalorder %s11, 0
      %p130 = por %p128, %p129
      %p131 = scmp.ne.s32.totalorder %s120, %s123
      %p132 = scmp.eq.s32.totalorder %s16, 3
      %p133 = por %p131, %p132
      %p134 = scmp.ne.s32.totalorder %s123, %s124
      %p135 = scmp.eq.s32.totalorder %s16, 0
      %p136 = por %p134, %p135
      %p137 = scmp.ne.s32.totalorder %s123, %s124
      %p138 = scmp.eq.s32.totalorder %s17, 3
      %p139 = por %p137, %p138
      %p141 = scmp.ne.s32.totalorder %s124, %s140
      %p142 = scmp.eq.s32.totalorder %s17, 0
      %p143 = por %p141, %p142
      %s144 = ssub.s32 %s11, %s18
      %p145 = scmp.eq.s32.totalorder %s144, 0
      %s147 = sadd.s32 %s146, 1
      %s148 = scalar_select %p145, %s146, %s147
      %p151 = pneg %p145
      %p152 = scmp.eq.s32.totalorder %s11, 3
      %p153 = por %p151, %p152
      %p154 = scmp.ne.s32.totalorder %s146, %s149
      %p155 = scmp.eq.s32.totalorder %s11, 0
      %p156 = por %p154, %p155
      %p157 = scmp.ne.s32.totalorder %s146, %s149
      %p158 = scmp.eq.s32.totalorder %s16, 3
      %p159 = por %p157, %p158
      %p160 = scmp.ne.s32.totalorder %s149, %s150
      %p161 = scmp.eq.s32.totalorder %s16, 0
      %p162 = por %p160, %p161
      %p163 = scmp.ne.s32.totalorder %s149, %s150
      %p164 = scmp.eq.s32.totalorder %s17, 3
      %p165 = por %p163, %p164
      %p167 = scmp.ne.s32.totalorder %s150, %s166
      %p168 = scmp.eq.s32.totalorder %s17, 0
      %p169 = por %p167, %p168
      %p170 = scmp.le.s32.totalorder 1, %s11
      %p171 = scmp.lt.s32.totalorder %s11, 5
      %p172 = pnand %p170, %p171
      %p173 = pneg %p172
      // Predicated region
      $region9: #{full_rel_pos.1} parent=5 // pred_check
        _
      $region10: #{full_rel_pos.1} parent=5 // pred_check_branch
        %175 = sbr.rel (%p172) target = $region12
      $region11: #{full_rel_pos.1} parent=5 // pred_region
        %s176 = ssub.s32 %s11, 1
        // Predicated region
        $region13: #{full_rel_pos.1} parent=11 // pred_check
          %p177 = pneg %p110
        $region14: #{full_rel_pos.1} parent=11 // pred_check_branch
          %179 = sbr.rel (%p177) target = $region16
        $region15: #{full_rel_pos.1} parent=11 // pred_region
          _
        $region16: #{full_rel_pos.1} parent=11 // pred_fallthru
          _
      $region12: #{full_rel_pos.1} parent=5 // pred_fallthru
        _
      %p180 = scmp.lt.s32.totalorder %s11, 4
      // Predicated region
      $region17: #{full_rel_pos.1} parent=5 // pred_check
        %p181 = pneg %p180
      $region18: #{full_rel_pos.1} parent=5 // pred_check_branch
        %183 = sbr.rel (%p181) target = $region20
      $region19: #{full_rel_pos.1} parent=5 // pred_region
        // Predicated region
        $region21: #{full_rel_pos.1} parent=19 // pred_check
          %p184 = pneg %p31
        $region22: #{full_rel_pos.1} parent=19 // pred_check_branch
          %186 = sbr.rel (%p184) target = $region24
        $region23: #{full_rel_pos.1} parent=19 // pred_region
          %s187 = sand.u32 %s21, 1
          %s188 = sand.u32 %s21, 1
          %s189 = smul.addr %s188, 16
          %s190 = scalar_lea.vmem [#allocation2], %s189
          %s191 = smul.addr %s11, 4
          %s192 = smul.addr %s191, 2
          %s193 = scalar_lea.vmem %s0, %s192
          // Predicated region
          $region25: #{full_rel_pos.1} parent=23 // pred_check
            _
          $region26: #{full_rel_pos.1} parent=23 // pred_check_branch
            %195 = sbr.rel (0) target = $region28
          $region27: #{full_rel_pos.1} parent=23 // pred_region
            // Predicated region
            $region29: #{full_rel_pos.1} parent=27 // pred_check
              _
            $region30: #{full_rel_pos.1} parent=27 // pred_check_branch
              %197 = sbr.rel target = $region32
            $region31: #{full_rel_pos.1} parent=27 // pred_region
              // Predicated region
              $region44: #{full_rel_pos.1} parent=31 // pred_check
                _
              $region45: #{full_rel_pos.1} parent=31 // pred_check_branch
                %227 = sbr.rel (0) target = $region47
              $region46: #{full_rel_pos.1} parent=31 // pred_region
                loop: start=0, step=1, limit=1
                $region48: #{full_rel_pos.1} parent=46 // loop_pre_header
                  _
                $region49: #{full_rel_pos.1} parent=46 // loop_header
                  %s229 = sphi 0, %s233
                  %p230 = scmp.ge.s32.totalorder %s229, 1
                  %s234 = sphi %s193, %s193
                  %s235 = sphi %s190, %s190
                $region50: #{full_rel_pos.1} parent=46 // loop_header_branch
                  %232 = sbr.rel (%p230) target = $region54
                $region51: #{full_rel_pos.1} parent=46 // loop_body
                  _
                $region52: #{full_rel_pos.1} parent=46 // loop_footer
                  %s233 = sadd.s32 1, %s229
                $region53: #{full_rel_pos.1} parent=46 // loop_footer_branch
                  %228 = sbr.rel target = $region49
                $region54: #{full_rel_pos.1} parent=46 // loop_exit
                  _
                %s237 = ssub.s32 4, 1
                loop: start=0, step=1, limit=1
                $region55: #{full_rel_pos.1} parent=46 // loop_pre_header
                  _
                $region56: #{full_rel_pos.1} parent=46 // loop_header
                  %s239 = sphi 0, %s243
                  %p240 = scmp.ge.s32.totalorder %s239, 1
                  %s244 = sphi %s193, %s193
                  %s245 = sphi %s190, %s190
                $region57: #{full_rel_pos.1} parent=46 // loop_header_branch
                  %242 = sbr.rel (%p240) target = $region61
                $region58: #{full_rel_pos.1} parent=46 // loop_body
                  %v246 = vld [vmem:[%s244] sm:%s237]
                  %247 = vst [vmem:[%s245] sm:%s237] %v246
                  %v248 = vld [vmem:[%s244 + $0x2] sm:%s237]
                  %249 = vst [vmem:[%s245 + $0x2] sm:%s237] %v248
                  %v250 = vld [vmem:[%s244 + $0x4] sm:%s237]
                  %251 = vst [vmem:[%s245 + $0x4] sm:%s237] %v250
                  %v252 = vld [vmem:[%s244 + $0x6] sm:%s237]
                  %253 = vst [vmem:[%s245 + $0x6] sm:%s237] %v252
                  %v254 = vld [vmem:[%s244 + $0x20] sm:%s237]
                  %255 = vst [vmem:[%s245 + $0x8] sm:%s237] %v254
                  %v256 = vld [vmem:[%s244 + $0x22] sm:%s237]
                  %257 = vst [vmem:[%s245 + $0xa] sm:%s237] %v256
                  %v258 = vld [vmem:[%s244 + $0x24] sm:%s237]
                  %259 = vst [vmem:[%s245 + $0xc] sm:%s237] %v258
                  %v260 = vld [vmem:[%s244 + $0x26] sm:%s237]
                  %261 = vst [vmem:[%s245 + $0xe] sm:%s237] %v260
                $region59: #{full_rel_pos.1} parent=46 // loop_footer
                  %s243 = sadd.s32 1, %s239
                $region60: #{full_rel_pos.1} parent=46 // loop_footer_branch
                  %238 = sbr.rel target = $region56
                $region61: #{full_rel_pos.1} parent=46 // loop_exit
                  _
              $region47: #{full_rel_pos.1} parent=31 // pred_fallthru
                _
            $region32: #{full_rel_pos.1} parent=27 // pred_fallthru
              _
            // Predicated region
            $region33: #{full_rel_pos.1} parent=27 // pred_check
              _
            $region34: #{full_rel_pos.1} parent=27 // pred_check_branch
              %199 = sbr.rel (0) target = $region36
            $region35: #{full_rel_pos.1} parent=27 // pred_region
              %s201 = ssub.s32 4, 1
              loop: start=0, step=1, limit=1
              $region37: #{full_rel_pos.1} parent=35 // loop_pre_header
                _
              $region38: #{full_rel_pos.1} parent=35 // loop_header
                %s203 = sphi 0, %s207
                %p204 = scmp.ge.s32.totalorder %s203, 1
                %s208 = sphi %s193, %s193
                %s209 = sphi %s190, %s190
              $region39: #{full_rel_pos.1} parent=35 // loop_header_branch
                %206 = sbr.rel (%p204) target = $region43
              $region40: #{full_rel_pos.1} parent=35 // loop_body
                %v210 = vld [vmem:[%s208] sm:%s201]
                %211 = vst [vmem:[%s209] sm:%s201] %v210
                %v212 = vld [vmem:[%s208 + $0x2] sm:%s201]
                %213 = vst [vmem:[%s209 + $0x2] sm:%s201] %v212
                %v214 = vld [vmem:[%s208 + $0x4] sm:%s201]
                %215 = vst [vmem:[%s209 + $0x4] sm:%s201] %v214
                %v216 = vld [vmem:[%s208 + $0x6] sm:%s201]
                %217 = vst [vmem:[%s209 + $0x6] sm:%s201] %v216
                %v218 = vld [vmem:[%s208 + $0x20] sm:%s201]
                %219 = vst [vmem:[%s209 + $0x8] sm:%s201] %v218
                %v220 = vld [vmem:[%s208 + $0x22] sm:%s201]
                %221 = vst [vmem:[%s209 + $0xa] sm:%s201] %v220
                %v222 = vld [vmem:[%s208 + $0x24] sm:%s201]
                %223 = vst [vmem:[%s209 + $0xc] sm:%s201] %v222
                %v224 = vld [vmem:[%s208 + $0x26] sm:%s201]
                %225 = vst [vmem:[%s209 + $0xe] sm:%s201] %v224
              $region41: #{full_rel_pos.1} parent=35 // loop_footer
                %s207 = sadd.s32 1, %s203
              $region42: #{full_rel_pos.1} parent=35 // loop_footer_branch
                %202 = sbr.rel target = $region38
              $region43: #{full_rel_pos.1} parent=35 // loop_exit
                _
            $region36: #{full_rel_pos.1} parent=27 // pred_fallthru
              _
          $region28: #{full_rel_pos.1} parent=23 // pred_fallthru
            _
          %262 = vnop
        $region24: #{full_rel_pos.1} parent=19 // pred_fallthru
          _
        // Predicated region
        $region62: #{full_rel_pos.1} parent=19 // pred_check
          %p263 = pneg %p57
        $region63: #{full_rel_pos.1} parent=19 // pred_check_branch
          %265 = sbr.rel (%p263) target = $region65
        $region64: #{full_rel_pos.1} parent=19 // pred_region
          %s266 = sand.u32 %s47, 1
          %s267 = sand.u32 %s47, 1
          %s268 = smul.addr %s267, 16
          %s269 = scalar_lea.vmem [#allocation3], %s268
          %s270 = smul.addr %s11, 4
          %s271 = smul.addr %s270, 2
          %s272 = scalar_lea.vmem %s1, %s271
          // Predicated region
          $region66: #{full_rel_pos.1} parent=64 // pred_check
            _
          $region67: #{full_rel_pos.1} parent=64 // pred_check_branch
            %274 = sbr.rel (0) target = $region69
          $region68: #{full_rel_pos.1} parent=64 // pred_region
            // Predicated region
            $region70: #{full_rel_pos.1} parent=68 // pred_check
              _
            $region71: #{full_rel_pos.1} parent=68 // pred_check_branch
              %276 = sbr.rel target = $region73
            $region72: #{full_rel_pos.1} parent=68 // pred_region
              // Predicated region
              $region85: #{full_rel_pos.1} parent=72 // pred_check
                _
              $region86: #{full_rel_pos.1} parent=72 // pred_check_branch
                %306 = sbr.rel (0) target = $region88
              $region87: #{full_rel_pos.1} parent=72 // pred_region
                loop: start=0, step=1, limit=1
                $region89: #{full_rel_pos.1} parent=87 // loop_pre_header
                  _
                $region90: #{full_rel_pos.1} parent=87 // loop_header
                  %s308 = sphi 0, %s312
                  %p309 = scmp.ge.s32.totalorder %s308, 1
                  %s313 = sphi %s272, %s272
                  %s314 = sphi %s269, %s269
                $region91: #{full_rel_pos.1} parent=87 // loop_header_branch
                  %311 = sbr.rel (%p309) target = $region95
                $region92: #{full_rel_pos.1} parent=87 // loop_body
                  _
                $region93: #{full_rel_pos.1} parent=87 // loop_footer
                  %s312 = sadd.s32 1, %s308
                $region94: #{full_rel_pos.1} parent=87 // loop_footer_branch
                  %307 = sbr.rel target = $region90
                $region95: #{full_rel_pos.1} parent=87 // loop_exit
                  _
                %s316 = ssub.s32 4, 1
                loop: start=0, step=1, limit=1
                $region96: #{full_rel_pos.1} parent=87 // loop_pre_header
                  _
                $region97: #{full_rel_pos.1} parent=87 // loop_header
                  %s318 = sphi 0, %s322
                  %p319 = scmp.ge.s32.totalorder %s318, 1
                  %s323 = sphi %s272, %s272
                  %s324 = sphi %s269, %s269
                $region98: #{full_rel_pos.1} parent=87 // loop_header_branch
                  %321 = sbr.rel (%p319) target = $region102
                $region99: #{full_rel_pos.1} parent=87 // loop_body
                  %v325 = vld [vmem:[%s323] sm:%s316]
                  %326 = vst [vmem:[%s324] sm:%s316] %v325
                  %v327 = vld [vmem:[%s323 + $0x2] sm:%s316]
                  %328 = vst [vmem:[%s324 + $0x2] sm:%s316] %v327
                  %v329 = vld [vmem:[%s323 + $0x4] sm:%s316]
                  %330 = vst [vmem:[%s324 + $0x4] sm:%s316] %v329
                  %v331 = vld [vmem:[%s323 + $0x6] sm:%s316]
                  %332 = vst [vmem:[%s324 + $0x6] sm:%s316] %v331
                  %v333 = vld [vmem:[%s323 + $0x20] sm:%s316]
                  %334 = vst [vmem:[%s324 + $0x8] sm:%s316] %v333
                  %v335 = vld [vmem:[%s323 + $0x22] sm:%s316]
                  %336 = vst [vmem:[%s324 + $0xa] sm:%s316] %v335
                  %v337 = vld [vmem:[%s323 + $0x24] sm:%s316]
                  %338 = vst [vmem:[%s324 + $0xc] sm:%s316] %v337
                  %v339 = vld [vmem:[%s323 + $0x26] sm:%s316]
                  %340 = vst [vmem:[%s324 + $0xe] sm:%s316] %v339
                $region100: #{full_rel_pos.1} parent=87 // loop_footer
                  %s322 = sadd.s32 1, %s318
                $region101: #{full_rel_pos.1} parent=87 // loop_footer_branch
                  %317 = sbr.rel target = $region97
                $region102: #{full_rel_pos.1} parent=87 // loop_exit
                  _
              $region88: #{full_rel_pos.1} parent=72 // pred_fallthru
                _
            $region73: #{full_rel_pos.1} parent=68 // pred_fallthru
              _
            // Predicated region
            $region74: #{full_rel_pos.1} parent=68 // pred_check
              _
            $region75: #{full_rel_pos.1} parent=68 // pred_check_branch
              %278 = sbr.rel (0) target = $region77
            $region76: #{full_rel_pos.1} parent=68 // pred_region
              %s280 = ssub.s32 4, 1
              loop: start=0, step=1, limit=1
              $region78: #{full_rel_pos.1} parent=76 // loop_pre_header
                _
              $region79: #{full_rel_pos.1} parent=76 // loop_header
                %s282 = sphi 0, %s286
                %p283 = scmp.ge.s32.totalorder %s282, 1
                %s287 = sphi %s272, %s272
                %s288 = sphi %s269, %s269
              $region80: #{full_rel_pos.1} parent=76 // loop_header_branch
                %285 = sbr.rel (%p283) target = $region84
              $region81: #{full_rel_pos.1} parent=76 // loop_body
                %v289 = vld [vmem:[%s287] sm:%s280]
                %290 = vst [vmem:[%s288] sm:%s280] %v289
                %v291 = vld [vmem:[%s287 + $0x2] sm:%s280]
                %292 = vst [vmem:[%s288 + $0x2] sm:%s280] %v291
                %v293 = vld [vmem:[%s287 + $0x4] sm:%s280]
                %294 = vst [vmem:[%s288 + $0x4] sm:%s280] %v293
                %v295 = vld [vmem:[%s287 + $0x6] sm:%s280]
                %296 = vst [vmem:[%s288 + $0x6] sm:%s280] %v295
                %v297 = vld [vmem:[%s287 + $0x20] sm:%s280]
                %298 = vst [vmem:[%s288 + $0x8] sm:%s280] %v297
                %v299 = vld [vmem:[%s287 + $0x22] sm:%s280]
                %300 = vst [vmem:[%s288 + $0xa] sm:%s280] %v299
                %v301 = vld [vmem:[%s287 + $0x24] sm:%s280]
                %302 = vst [vmem:[%s288 + $0xc] sm:%s280] %v301
                %v303 = vld [vmem:[%s287 + $0x26] sm:%s280]
                %304 = vst [vmem:[%s288 + $0xe] sm:%s280] %v303
              $region82: #{full_rel_pos.1} parent=76 // loop_footer
                %s286 = sadd.s32 1, %s282
              $region83: #{full_rel_pos.1} parent=76 // loop_footer_branch
                %281 = sbr.rel target = $region79
              $region84: #{full_rel_pos.1} parent=76 // loop_exit
                _
            $region77: #{full_rel_pos.1} parent=68 // pred_fallthru
              _
          $region69: #{full_rel_pos.1} parent=64 // pred_fallthru
            _
          %341 = vnop
        $region65: #{full_rel_pos.1} parent=19 // pred_fallthru
          _
        // Predicated region
        $region103: #{full_rel_pos.1} parent=19 // pred_check
          %p342 = pneg %p83
        $region104: #{full_rel_pos.1} parent=19 // pred_check_branch
          %344 = sbr.rel (%p342) target = $region106
        $region105: #{full_rel_pos.1} parent=19 // pred_region
          %p345 = scmp.lt.s32.totalorder %s11, 3
          %s346 = scalar_select %p345, %s11, 3
          %s347 = smul.addr %s346, 2
          %s348 = smul.addr %s347, 8
          %s349 = scalar_lea.vmem %s2, %s348
        $region106: #{full_rel_pos.1} parent=19 // pred_fallthru
          _
        // Predicated region
        $region107: #{full_rel_pos.1} parent=19 // pred_check
          %p350 = pneg %p130
        $region108: #{full_rel_pos.1} parent=19 // pred_check_branch
          %352 = sbr.rel (%p350) target = $region110
        $region109: #{full_rel_pos.1} parent=19 // pred_region
          %s353 = sand.u32 %s120, 1
          %s354 = sand.u32 %s120, 1
          %s355 = smul.addr %s354, 16
          %s356 = scalar_lea.vmem [#allocation4], %s355
          %s357 = smul.addr %s11, 4
          %s358 = smul.addr %s357, 2
          %s359 = scalar_lea.vmem %s4, %s358
          // Predicated region
          $region111: #{full_rel_pos.1} parent=109 // pred_check
            _
          $region112: #{full_rel_pos.1} parent=109 // pred_check_branch
            %361 = sbr.rel (0) target = $region114
          $region113: #{full_rel_pos.1} parent=109 // pred_region
            // Predicated region
            $region115: #{full_rel_pos.1} parent=113 // pred_check
              _
            $region116: #{full_rel_pos.1} parent=113 // pred_check_branch
              %363 = sbr.rel target = $region118
            $region117: #{full_rel_pos.1} parent=113 // pred_region
              // Predicated region
              $region130: #{full_rel_pos.1} parent=117 // pred_check
                _
              $region131: #{full_rel_pos.1} parent=117 // pred_check_branch
                %393 = sbr.rel (0) target = $region133
              $region132: #{full_rel_pos.1} parent=117 // pred_region
                loop: start=0, step=1, limit=1
                $region134: #{full_rel_pos.1} parent=132 // loop_pre_header
                  _
                $region135: #{full_rel_pos.1} parent=132 // loop_header
                  %s395 = sphi 0, %s399
                  %p396 = scmp.ge.s32.totalorder %s395, 1
                  %s400 = sphi %s359, %s359
                  %s401 = sphi %s356, %s356
                $region136: #{full_rel_pos.1} parent=132 // loop_header_branch
                  %398 = sbr.rel (%p396) target = $region140
                $region137: #{full_rel_pos.1} parent=132 // loop_body
                  _
                $region138: #{full_rel_pos.1} parent=132 // loop_footer
                  %s399 = sadd.s32 1, %s395
                $region139: #{full_rel_pos.1} parent=132 // loop_footer_branch
                  %394 = sbr.rel target = $region135
                $region140: #{full_rel_pos.1} parent=132 // loop_exit
                  _
                %s403 = ssub.s32 4, 1
                loop: start=0, step=1, limit=1
                $region141: #{full_rel_pos.1} parent=132 // loop_pre_header
                  _
                $region142: #{full_rel_pos.1} parent=132 // loop_header
                  %s405 = sphi 0, %s409
                  %p406 = scmp.ge.s32.totalorder %s405, 1
                  %s410 = sphi %s359, %s359
                  %s411 = sphi %s356, %s356
                $region143: #{full_rel_pos.1} parent=132 // loop_header_branch
                  %408 = sbr.rel (%p406) target = $region147
                $region144: #{full_rel_pos.1} parent=132 // loop_body
                  %v412 = vld [vmem:[%s410] sm:%s403]
                  %413 = vst [vmem:[%s411] sm:%s403] %v412
                  %v414 = vld [vmem:[%s410 + $0x2] sm:%s403]
                  %415 = vst [vmem:[%s411 + $0x2] sm:%s403] %v414
                  %v416 = vld [vmem:[%s410 + $0x4] sm:%s403]
                  %417 = vst [vmem:[%s411 + $0x4] sm:%s403] %v416
                  %v418 = vld [vmem:[%s410 + $0x6] sm:%s403]
                  %419 = vst [vmem:[%s411 + $0x6] sm:%s403] %v418
                  %v420 = vld [vmem:[%s410 + $0x20] sm:%s403]
                  %421 = vst [vmem:[%s411 + $0x8] sm:%s403] %v420
                  %v422 = vld [vmem:[%s410 + $0x22] sm:%s403]
                  %423 = vst [vmem:[%s411 + $0xa] sm:%s403] %v422
                  %v424 = vld [vmem:[%s410 + $0x24] sm:%s403]
                  %425 = vst [vmem:[%s411 + $0xc] sm:%s403] %v424
                  %v426 = vld [vmem:[%s410 + $0x26] sm:%s403]
                  %427 = vst [vmem:[%s411 + $0xe] sm:%s403] %v426
                $region145: #{full_rel_pos.1} parent=132 // loop_footer
                  %s409 = sadd.s32 1, %s405
                $region146: #{full_rel_pos.1} parent=132 // loop_footer_branch
                  %404 = sbr.rel target = $region142
                $region147: #{full_rel_pos.1} parent=132 // loop_exit
                  _
              $region133: #{full_rel_pos.1} parent=117 // pred_fallthru
                _
            $region118: #{full_rel_pos.1} parent=113 // pred_fallthru
              _
            // Predicated region
            $region119: #{full_rel_pos.1} parent=113 // pred_check
              _
            $region120: #{full_rel_pos.1} parent=113 // pred_check_branch
              %365 = sbr.rel (0) target = $region122
            $region121: #{full_rel_pos.1} parent=113 // pred_region
              %s367 = ssub.s32 4, 1
              loop: start=0, step=1, limit=1
              $region123: #{full_rel_pos.1} parent=121 // loop_pre_header
                _
              $region124: #{full_rel_pos.1} parent=121 // loop_header
                %s369 = sphi 0, %s373
                %p370 = scmp.ge.s32.totalorder %s369, 1
                %s374 = sphi %s359, %s359
                %s375 = sphi %s356, %s356
              $region125: #{full_rel_pos.1} parent=121 // loop_header_branch
                %372 = sbr.rel (%p370) target = $region129
              $region126: #{full_rel_pos.1} parent=121 // loop_body
                %v376 = vld [vmem:[%s374] sm:%s367]
                %377 = vst [vmem:[%s375] sm:%s367] %v376
                %v378 = vld [vmem:[%s374 + $0x2] sm:%s367]
                %379 = vst [vmem:[%s375 + $0x2] sm:%s367] %v378
                %v380 = vld [vmem:[%s374 + $0x4] sm:%s367]
                %381 = vst [vmem:[%s375 + $0x4] sm:%s367] %v380
                %v382 = vld [vmem:[%s374 + $0x6] sm:%s367]
                %383 = vst [vmem:[%s375 + $0x6] sm:%s367] %v382
                %v384 = vld [vmem:[%s374 + $0x20] sm:%s367]
                %385 = vst [vmem:[%s375 + $0x8] sm:%s367] %v384
                %v386 = vld [vmem:[%s374 + $0x22] sm:%s367]
                %387 = vst [vmem:[%s375 + $0xa] sm:%s367] %v386
                %v388 = vld [vmem:[%s374 + $0x24] sm:%s367]
                %389 = vst [vmem:[%s375 + $0xc] sm:%s367] %v388
                %v390 = vld [vmem:[%s374 + $0x26] sm:%s367]
                %391 = vst [vmem:[%s375 + $0xe] sm:%s367] %v390
              $region127: #{full_rel_pos.1} parent=121 // loop_footer
                %s373 = sadd.s32 1, %s369
              $region128: #{full_rel_pos.1} parent=121 // loop_footer_branch
                %368 = sbr.rel target = $region124
              $region129: #{full_rel_pos.1} parent=121 // loop_exit
                _
            $region122: #{full_rel_pos.1} parent=113 // pred_fallthru
              _
          $region114: #{full_rel_pos.1} parent=109 // pred_fallthru
            _
          %428 = vnop
        $region110: #{full_rel_pos.1} parent=19 // pred_fallthru
          _
      $region20: #{full_rel_pos.1} parent=5 // pred_fallthru
        _
      %p429 = scmp.le.s32.totalorder 1, %s11
      %p430 = scmp.lt.s32.totalorder %s11, 5
      %p431 = pnand %p429, %p430
      %p432 = pneg %p431
      // Predicated region
      $region148: #{full_rel_pos.1} parent=5 // pred_check
        _
      $region149: #{full_rel_pos.1} parent=5 // pred_check_branch
        %434 = sbr.rel (%p431) target = $region151
      $region150: #{full_rel_pos.1} parent=5 // pred_region
        %s435 = ssub.s32 %s11, 1
        %s436 = sand.u32 %s24, 1
        %s437 = sand.u32 %s24, 1
        %s438 = smul.addr %s437, 16
        %s439 = scalar_lea.vmem [#allocation2], %s438
        // Predicated region
        $region152: #{full_rel_pos.1} parent=150 // pred_check
          %p440 = pneg %p37
        $region153: #{full_rel_pos.1} parent=150 // pred_check_branch
          %442 = sbr.rel (%p440) target = $region155
        $region154: #{full_rel_pos.1} parent=150 // pred_region
          _
        $region155: #{full_rel_pos.1} parent=150 // pred_fallthru
          _
        %s443 = sand.u32 %s50, 1
        %s444 = sand.u32 %s50, 1
        %s445 = smul.addr %s444, 16
        %s446 = scalar_lea.vmem [#allocation3], %s445
        // Predicated region
        $region156: #{full_rel_pos.1} parent=150 // pred_check
          %p447 = pneg %p63
        $region157: #{full_rel_pos.1} parent=150 // pred_check_branch
          %449 = sbr.rel (%p447) target = $region159
        $region158: #{full_rel_pos.1} parent=150 // pred_region
          _
        $region159: #{full_rel_pos.1} parent=150 // pred_fallthru
          _
        %s450 = sand.u32 %s123, 1
        %s451 = sand.u32 %s123, 1
        %s452 = smul.addr %s451, 16
        %s453 = scalar_lea.vmem [#allocation4], %s452
        // Predicated region
        $region160: #{full_rel_pos.1} parent=150 // pred_check
          %p454 = pneg %p136
        $region161: #{full_rel_pos.1} parent=150 // pred_check_branch
          %456 = sbr.rel (%p454) target = $region163
        $region162: #{full_rel_pos.1} parent=150 // pred_region
          _
        $region163: #{full_rel_pos.1} parent=150 // pred_fallthru
          _
        %s457 = sand.u32 %s24, 1
        %s458 = sand.u32 %s24, 1
        %s459 = smul.addr %s458, 16
        %s460 = scalar_lea.vmem [#allocation2], %s459
        %p461 = pneg %p37
        %p462 = pneg %p34
        %s463 = sand.u32 %s50, 1
        %s464 = sand.u32 %s50, 1
        %s465 = smul.addr %s464, 16
        %s466 = scalar_lea.vmem [#allocation3], %s465
        %p467 = pneg %p63
        %p468 = pneg %p60
        %p469 = scmp.lt.s32.totalorder %s16, 3
        %s470 = scalar_select %p469, %s16, 3
        %s471 = smul.addr %s470, 2
        %s472 = smul.addr %s471, 8
        %s473 = scalar_lea.vmem %s2, %s472
        %p474 = pneg %p89
        %p475 = pneg %p86
        %p476 = pneg %p110
        %p477 = pneg %p107
        %s478 = sand.u32 %s123, 1
        %s479 = sand.u32 %s123, 1
        %s480 = smul.addr %s479, 16
        %s481 = scalar_lea.vmem [#allocation4], %s480
        %p482 = pneg %p136
        %p483 = pneg %p133
        %p484 = pneg %p162
        %p485 = pneg %p159
        %s486 = sand.u32 %s149, 1
        %s487 = sand.u32 %s149, 1
        %s488 = smul.addr %s487, 16
        %s489 = scalar_lea.vmem [#allocation5], %s488
        %p490 = scmp.lt.s32.totalorder %s16, 3
        %s491 = scalar_select %p490, %s16, 3
        %s492 = smul.addr %s491, 2
        %s493 = smul.addr %s492, 8
        %s494 = scalar_lea.vmem %s2, %s493
        %v495 = vld [vmem:[%s3] sm:$0xff]
        %v496 = vld [vmem:[%s3 + $0x8] sm:$0xff]
        %v497 = vld [vmem:[%s3 + $0x10] sm:$0xff]
        %v498 = vld [vmem:[%s3 + $0x18] sm:$0xff]
        %v499 = vld [vmem:[%s3 + $0x20] sm:$0xff]
        %v500 = vld [vmem:[%s3 + $0x28] sm:$0xff]
        %v501 = vld [vmem:[%s3 + $0x30] sm:$0xff]
        %v502 = vld [vmem:[%s3 + $0x38] sm:$0xff]
        %v503 = vld [vmem:[%s494] sm:$0xff]
        %v504 = vld [vmem:[%s494 + $0x8] sm:$0xff]
        %v505 = vld [vmem:[%s439] sm:$0x3]
        %v506 = vld [vmem:[%s439 + $0x2] sm:$0x3]
        %v507 = vld [vmem:[%s439 + $0x4] sm:$0x3]
        %v508 = vld [vmem:[%s439 + $0x6] sm:$0x3]
        %v509 = vld [vmem:[%s446] sm:$0x3]
        %v510 = vld [vmem:[%s446 + $0x2] sm:$0x3]
        %v511 = vld [vmem:[%s446 + $0x4] sm:$0x3]
        %v512 = vld [vmem:[%s446 + $0x6] sm:$0x3]
        %vm513 = vcmask 130048
        %v515 = vsel %vm513, %v509, 0
        %517 = vmatpush.msra.mxu0 0.0
        %518 = vmatpush.msra.mxu0 0.0
        %519 = vmatpush.msra.mxu0 0.0
        %520 = vmatpush.msra.mxu0 0.0
        %521 = vmatpush.msra.mxu0 0.0
        %522 = vmatpush.msra.mxu0 0.0
        %523 = vmatpush.msra.mxu0 0.0
        %524 = vmatpush.msra.mxu0 0.0
        %525 = vmatpush.msra.mxu0 0.0
        %526 = vmatpush.msra.mxu0 0.0
        %527 = vmatpush.msra.mxu0 0.0
        %528 = vmatpush.msra.mxu0 0.0
        %529 = vmatpush.msra.mxu0 0.0
        %530 = vmatpush.msra.mxu0 0.0
        %531 = vmatpush.msra.mxu0 %v496
        %532 = vmatpush.msra.mxu0 %v495
        %533 = vmatmul.f32.gmra.mxu0 %v515
        %v534 = vpop.f32.mrf.mxu0
        %v535 = vadd.f32 0.0, %v534
        %536 = vdwg.mxu0
        %v538 = vsel %vm513, %v510, 0
        %540 = vmatpush.msra.mxu0 0.0
        %541 = vmatpush.msra.mxu0 0.0
        %542 = vmatpush.msra.mxu0 0.0
        %543 = vmatpush.msra.mxu0 0.0
        %544 = vmatpush.msra.mxu0 0.0
        %545 = vmatpush.msra.mxu0 0.0
        %546 = vmatpush.msra.mxu0 0.0
        %547 = vmatpush.msra.mxu0 0.0
        %548 = vmatpush.msra.mxu0 0.0
        %549 = vmatpush.msra.mxu0 0.0
        %550 = vmatpush.msra.mxu0 0.0
        %551 = vmatpush.msra.mxu0 0.0
        %552 = vmatpush.msra.mxu0 0.0
        %553 = vmatpush.msra.mxu0 0.0
        %554 = vmatpush.msra.mxu0 %v498
        %555 = vmatpush.msra.mxu0 %v497
        %556 = vmatmul.f32.gmra.mxu0 %v538
        %v557 = vpop.f32.mrf.mxu0
        %v558 = vadd.f32 0.0, %v557
        %559 = vdwg.mxu0
        %v561 = vsel %vm513, %v511, 0
        %563 = vmatpush.msra.mxu0 0.0
        %564 = vmatpush.msra.mxu0 0.0
        %565 = vmatpush.msra.mxu0 0.0
        %566 = vmatpush.msra.mxu0 0.0
        %567 = vmatpush.msra.mxu0 0.0
        %568 = vmatpush.msra.mxu0 0.0
        %569 = vmatpush.msra.mxu0 0.0
        %570 = vmatpush.msra.mxu0 0.0
        %571 = vmatpush.msra.mxu0 0.0
        %572 = vmatpush.msra.mxu0 0.0
        %573 = vmatpush.msra.mxu0 0.0
        %574 = vmatpush.msra.mxu0 0.0
        %575 = vmatpush.msra.mxu0 0.0
        %576 = vmatpush.msra.mxu0 0.0
        %577 = vmatpush.msra.mxu0 %v500
        %578 = vmatpush.msra.mxu0 %v499
        %579 = vmatmul.f32.gmra.mxu0 %v561
        %v580 = vpop.f32.mrf.mxu0
        %v581 = vadd.f32 0.0, %v580
        %582 = vdwg.mxu0
        %v584 = vsel %vm513, %v512, 0
        %586 = vmatpush.msra.mxu0 0.0
        %587 = vmatpush.msra.mxu0 0.0
        %588 = vmatpush.msra.mxu0 0.0
        %589 = vmatpush.msra.mxu0 0.0
        %590 = vmatpush.msra.mxu0 0.0
        %591 = vmatpush.msra.mxu0 0.0
        %592 = vmatpush.msra.mxu0 0.0
        %593 = vmatpush.msra.mxu0 0.0
        %594 = vmatpush.msra.mxu0 0.0
        %595 = vmatpush.msra.mxu0 0.0
        %596 = vmatpush.msra.mxu0 0.0
        %597 = vmatpush.msra.mxu0 0.0
        %598 = vmatpush.msra.mxu0 0.0
        %599 = vmatpush.msra.mxu0 0.0
        %600 = vmatpush.msra.mxu0 %v502
        %601 = vmatpush.msra.mxu0 %v501
        %602 = vmatmul.f32.gmra.mxu0 %v584
        %v603 = vpop.f32.mrf.mxu0
        %v604 = vadd.f32 0.0, %v603
        %605 = vdwg.mxu0
        %v607 = vsel %vm513, %v505, 0
        %609 = vmatpush.msra.mxu0 0.0
        %610 = vmatpush.msra.mxu0 0.0
        %611 = vmatpush.msra.mxu0 0.0
        %612 = vmatpush.msra.mxu0 0.0
        %613 = vmatpush.msra.mxu0 0.0
        %614 = vmatpush.msra.mxu0 0.0
        %615 = vmatpush.msra.mxu0 0.0
        %616 = vmatpush.msra.mxu0 0.0
        %617 = vmatpush.msra.mxu0 0.0
        %618 = vmatpush.msra.mxu0 0.0
        %619 = vmatpush.msra.mxu0 0.0
        %620 = vmatpush.msra.mxu0 0.0
        %621 = vmatpush.msra.mxu0 0.0
        %622 = vmatpush.msra.mxu0 0.0
        %623 = vmatpush.msra.mxu0 %v504
        %624 = vmatpush.msra.mxu0 %v503
        %625 = vmatmul.f32.gmra.mxu0 %v607
        %v626 = vpop.f32.mrf.mxu0
        %v627 = vadd.f32 %v535, %v626
        %628 = vdwg.mxu0
        %v630 = vsel %vm513, %v506, 0
        %632 = vmatpush.msra.mxu0 0.0
        %633 = vmatpush.msra.mxu0 0.0
        %634 = vmatpush.msra.mxu0 0.0
        %635 = vmatpush.msra.mxu0 0.0
        %636 = vmatpush.msra.mxu0 0.0
        %637 = vmatpush.msra.mxu0 0.0
        %638 = vmatpush.msra.mxu0 0.0
        %639 = vmatpush.msra.mxu0 0.0
        %640 = vmatpush.msra.mxu0 0.0
        %641 = vmatpush.msra.mxu0 0.0
        %642 = vmatpush.msra.mxu0 0.0
        %643 = vmatpush.msra.mxu0 0.0
        %644 = vmatpush.msra.mxu0 0.0
        %645 = vmatpush.msra.mxu0 0.0
        %646 = vmatpush.msra.mxu0 %v504
        %647 = vmatpush.msra.mxu0 %v503
        %648 = vmatmul.f32.gmra.mxu0 %v630
        %v649 = vpop.f32.mrf.mxu0
        %v650 = vadd.f32 %v558, %v649
        %651 = vdwg.mxu0
        %v653 = vsel %vm513, %v507, 0
        %655 = vmatpush.msra.mxu0 0.0
        %656 = vmatpush.msra.mxu0 0.0
        %657 = vmatpush.msra.mxu0 0.0
        %658 = vmatpush.msra.mxu0 0.0
        %659 = vmatpush.msra.mxu0 0.0
        %660 = vmatpush.msra.mxu0 0.0
        %661 = vmatpush.msra.mxu0 0.0
        %662 = vmatpush.msra.mxu0 0.0
        %663 = vmatpush.msra.mxu0 0.0
        %664 = vmatpush.msra.mxu0 0.0
        %665 = vmatpush.msra.mxu0 0.0
        %666 = vmatpush.msra.mxu0 0.0
        %667 = vmatpush.msra.mxu0 0.0
        %668 = vmatpush.msra.mxu0 0.0
        %669 = vmatpush.msra.mxu0 %v504
        %670 = vmatpush.msra.mxu0 %v503
        %671 = vmatmul.f32.gmra.mxu0 %v653
        %v672 = vpop.f32.mrf.mxu0
        %v673 = vadd.f32 %v581, %v672
        %674 = vdwg.mxu0
        %v676 = vsel %vm513, %v508, 0
        %678 = vmatpush.msra.mxu0 0.0
        %679 = vmatpush.msra.mxu0 0.0
        %680 = vmatpush.msra.mxu0 0.0
        %681 = vmatpush.msra.mxu0 0.0
        %682 = vmatpush.msra.mxu0 0.0
        %683 = vmatpush.msra.mxu0 0.0
        %684 = vmatpush.msra.mxu0 0.0
        %685 = vmatpush.msra.mxu0 0.0
        %686 = vmatpush.msra.mxu0 0.0
        %687 = vmatpush.msra.mxu0 0.0
        %688 = vmatpush.msra.mxu0 0.0
        %689 = vmatpush.msra.mxu0 0.0
        %690 = vmatpush.msra.mxu0 0.0
        %691 = vmatpush.msra.mxu0 0.0
        %692 = vmatpush.msra.mxu0 %v504
        %693 = vmatpush.msra.mxu0 %v503
        %694 = vmatmul.f32.gmra.mxu0 %v676
        %v695 = vpop.f32.mrf.mxu0
        %v696 = vadd.f32 %v604, %v695
        %697 = vdwg.mxu0
        %v698 = vld [vmem:[%s453] sm:$0x3]
        %v699 = vld [vmem:[%s453 + $0x2] sm:$0x3]
        %v700 = vld [vmem:[%s453 + $0x4] sm:$0x3]
        %v701 = vld [vmem:[%s453 + $0x6] sm:$0x3]
        %v702 = vadd.f32 %v698, %v627
        %v703 = vadd.f32 %v699, %v650
        %v704 = vadd.f32 %v700, %v673
        %v705 = vadd.f32 %v701, %v696
        %vm706 = vcmask 123904
        %707 = vst.msk [vmem:[%s489] sm:$0x3] %vm706, %v702
        %708 = vst.msk [vmem:[%s489 + $0x2] sm:$0x3] %vm706, %v703
        %709 = vst.msk [vmem:[%s489 + $0x4] sm:$0x3] %vm706, %v704
        %710 = vst.msk [vmem:[%s489 + $0x6] sm:$0x3] %vm706, %v705
        %s711 = scalar_lea.vmem %s439, 8 [#allocation2]
        %v712 = vld [vmem:[%s711] sm:$0x3]
        %v713 = vld [vmem:[%s711 + $0x2] sm:$0x3]
        %v714 = vld [vmem:[%s711 + $0x4] sm:$0x3]
        %v715 = vld [vmem:[%s711 + $0x6] sm:$0x3]
        %s716 = scalar_lea.vmem %s446, 8 [#allocation3]
        %v717 = vld [vmem:[%s716] sm:$0x3]
        %v718 = vld [vmem:[%s716 + $0x2] sm:$0x3]
        %v719 = vld [vmem:[%s716 + $0x4] sm:$0x3]
        %v720 = vld [vmem:[%s716 + $0x6] sm:$0x3]
        %v722 = vsel %vm513, %v717, 0
        %724 = vmatpush.msra.mxu0 0.0
        %725 = vmatpush.msra.mxu0 0.0
        %726 = vmatpush.msra.mxu0 0.0
        %727 = vmatpush.msra.mxu0 0.0
        %728 = vmatpush.msra.mxu0 0.0
        %729 = vmatpush.msra.mxu0 0.0
        %730 = vmatpush.msra.mxu0 0.0
        %731 = vmatpush.msra.mxu0 0.0
        %732 = vmatpush.msra.mxu0 0.0
        %733 = vmatpush.msra.mxu0 0.0
        %734 = vmatpush.msra.mxu0 0.0
        %735 = vmatpush.msra.mxu0 0.0
        %736 = vmatpush.msra.mxu0 0.0
        %737 = vmatpush.msra.mxu0 0.0
        %738 = vmatpush.msra.mxu0 %v496
        %739 = vmatpush.msra.mxu0 %v495
        %740 = vmatmul.f32.gmra.mxu0 %v722
        %v741 = vpop.f32.mrf.mxu0
        %v742 = vadd.f32 0.0, %v741
        %743 = vdwg.mxu0
        %v745 = vsel %vm513, %v718, 0
        %747 = vmatpush.msra.mxu0 0.0
        %748 = vmatpush.msra.mxu0 0.0
        %749 = vmatpush.msra.mxu0 0.0
        %750 = vmatpush.msra.mxu0 0.0
        %751 = vmatpush.msra.mxu0 0.0
        %752 = vmatpush.msra.mxu0 0.0
        %753 = vmatpush.msra.mxu0 0.0
        %754 = vmatpush.msra.mxu0 0.0
        %755 = vmatpush.msra.mxu0 0.0
        %756 = vmatpush.msra.mxu0 0.0
        %757 = vmatpush.msra.mxu0 0.0
        %758 = vmatpush.msra.mxu0 0.0
        %759 = vmatpush.msra.mxu0 0.0
        %760 = vmatpush.msra.mxu0 0.0
        %761 = vmatpush.msra.mxu0 %v498
        %762 = vmatpush.msra.mxu0 %v497
        %763 = vmatmul.f32.gmra.mxu0 %v745
        %v764 = vpop.f32.mrf.mxu0
        %v765 = vadd.f32 0.0, %v764
        %766 = vdwg.mxu0
        %v768 = vsel %vm513, %v719, 0
        %770 = vmatpush.msra.mxu0 0.0
        %771 = vmatpush.msra.mxu0 0.0
        %772 = vmatpush.msra.mxu0 0.0
        %773 = vmatpush.msra.mxu0 0.0
        %774 = vmatpush.msra.mxu0 0.0
        %775 = vmatpush.msra.mxu0 0.0
        %776 = vmatpush.msra.mxu0 0.0
        %777 = vmatpush.msra.mxu0 0.0
        %778 = vmatpush.msra.mxu0 0.0
        %779 = vmatpush.msra.mxu0 0.0
        %780 = vmatpush.msra.mxu0 0.0
        %781 = vmatpush.msra.mxu0 0.0
        %782 = vmatpush.msra.mxu0 0.0
        %783 = vmatpush.msra.mxu0 0.0
        %784 = vmatpush.msra.mxu0 %v500
        %785 = vmatpush.msra.mxu0 %v499
        %786 = vmatmul.f32.gmra.mxu0 %v768
        %v787 = vpop.f32.mrf.mxu0
        %v788 = vadd.f32 0.0, %v787
        %789 = vdwg.mxu0
        %v791 = vsel %vm513, %v720, 0
        %793 = vmatpush.msra.mxu0 0.0
        %794 = vmatpush.msra.mxu0 0.0
        %795 = vmatpush.msra.mxu0 0.0
        %796 = vmatpush.msra.mxu0 0.0
        %797 = vmatpush.msra.mxu0 0.0
        %798 = vmatpush.msra.mxu0 0.0
        %799 = vmatpush.msra.mxu0 0.0
        %800 = vmatpush.msra.mxu0 0.0
        %801 = vmatpush.msra.mxu0 0.0
        %802 = vmatpush.msra.mxu0 0.0
        %803 = vmatpush.msra.mxu0 0.0
        %804 = vmatpush.msra.mxu0 0.0
        %805 = vmatpush.msra.mxu0 0.0
        %806 = vmatpush.msra.mxu0 0.0
        %807 = vmatpush.msra.mxu0 %v502
        %808 = vmatpush.msra.mxu0 %v501
        %809 = vmatmul.f32.gmra.mxu0 %v791
        %v810 = vpop.f32.mrf.mxu0
        %v811 = vadd.f32 0.0, %v810
        %812 = vdwg.mxu0
        %v814 = vsel %vm513, %v712, 0
        %816 = vmatpush.msra.mxu0 0.0
        %817 = vmatpush.msra.mxu0 0.0
        %818 = vmatpush.msra.mxu0 0.0
        %819 = vmatpush.msra.mxu0 0.0
        %820 = vmatpush.msra.mxu0 0.0
        %821 = vmatpush.msra.mxu0 0.0
        %822 = vmatpush.msra.mxu0 0.0
        %823 = vmatpush.msra.mxu0 0.0
        %824 = vmatpush.msra.mxu0 0.0
        %825 = vmatpush.msra.mxu0 0.0
        %826 = vmatpush.msra.mxu0 0.0
        %827 = vmatpush.msra.mxu0 0.0
        %828 = vmatpush.msra.mxu0 0.0
        %829 = vmatpush.msra.mxu0 0.0
        %830 = vmatpush.msra.mxu0 %v504
        %831 = vmatpush.msra.mxu0 %v503
        %832 = vmatmul.f32.gmra.mxu0 %v814
        %v833 = vpop.f32.mrf.mxu0
        %v834 = vadd.f32 %v742, %v833
        %835 = vdwg.mxu0
        %v837 = vsel %vm513, %v713, 0
        %839 = vmatpush.msra.mxu0 0.0
        %840 = vmatpush.msra.mxu0 0.0
        %841 = vmatpush.msra.mxu0 0.0
        %842 = vmatpush.msra.mxu0 0.0
        %843 = vmatpush.msra.mxu0 0.0
        %844 = vmatpush.msra.mxu0 0.0
        %845 = vmatpush.msra.mxu0 0.0
        %846 = vmatpush.msra.mxu0 0.0
        %847 = vmatpush.msra.mxu0 0.0
        %848 = vmatpush.msra.mxu0 0.0
        %849 = vmatpush.msra.mxu0 0.0
        %850 = vmatpush.msra.mxu0 0.0
        %851 = vmatpush.msra.mxu0 0.0
        %852 = vmatpush.msra.mxu0 0.0
        %853 = vmatpush.msra.mxu0 %v504
        %854 = vmatpush.msra.mxu0 %v503
        %855 = vmatmul.f32.gmra.mxu0 %v837
        %v856 = vpop.f32.mrf.mxu0
        %v857 = vadd.f32 %v765, %v856
        %858 = vdwg.mxu0
        %v860 = vsel %vm513, %v714, 0
        %862 = vmatpush.msra.mxu0 0.0
        %863 = vmatpush.msra.mxu0 0.0
        %864 = vmatpush.msra.mxu0 0.0
        %865 = vmatpush.msra.mxu0 0.0
        %866 = vmatpush.msra.mxu0 0.0
        %867 = vmatpush.msra.mxu0 0.0
        %868 = vmatpush.msra.mxu0 0.0
        %869 = vmatpush.msra.mxu0 0.0
        %870 = vmatpush.msra.mxu0 0.0
        %871 = vmatpush.msra.mxu0 0.0
        %872 = vmatpush.msra.mxu0 0.0
        %873 = vmatpush.msra.mxu0 0.0
        %874 = vmatpush.msra.mxu0 0.0
        %875 = vmatpush.msra.mxu0 0.0
        %876 = vmatpush.msra.mxu0 %v504
        %877 = vmatpush.msra.mxu0 %v503
        %878 = vmatmul.f32.gmra.mxu0 %v860
        %v879 = vpop.f32.mrf.mxu0
        %v880 = vadd.f32 %v788, %v879
        %881 = vdwg.mxu0
        %v883 = vsel %vm513, %v715, 0
        %885 = vmatpush.msra.mxu0 0.0
        %886 = vmatpush.msra.mxu0 0.0
        %887 = vmatpush.msra.mxu0 0.0
        %888 = vmatpush.msra.mxu0 0.0
        %889 = vmatpush.msra.mxu0 0.0
        %890 = vmatpush.msra.mxu0 0.0
        %891 = vmatpush.msra.mxu0 0.0
        %892 = vmatpush.msra.mxu0 0.0
        %893 = vmatpush.msra.mxu0 0.0
        %894 = vmatpush.msra.mxu0 0.0
        %895 = vmatpush.msra.mxu0 0.0
        %896 = vmatpush.msra.mxu0 0.0
        %897 = vmatpush.msra.mxu0 0.0
        %898 = vmatpush.msra.mxu0 0.0
        %899 = vmatpush.msra.mxu0 %v504
        %900 = vmatpush.msra.mxu0 %v503
        %901 = vmatmul.f32.gmra.mxu0 %v883
        %v902 = vpop.f32.mrf.mxu0
        %v903 = vadd.f32 %v811, %v902
        %904 = vdwg.mxu0
        %s905 = scalar_lea.vmem %s453, 8 [#allocation4]
        %v906 = vld [vmem:[%s905] sm:$0x3]
        %v907 = vld [vmem:[%s905 + $0x2] sm:$0x3]
        %v908 = vld [vmem:[%s905 + $0x4] sm:$0x3]
        %v909 = vld [vmem:[%s905 + $0x6] sm:$0x3]
        %v910 = vadd.f32 %v906, %v834
        %v911 = vadd.f32 %v907, %v857
        %v912 = vadd.f32 %v908, %v880
        %v913 = vadd.f32 %v909, %v903
        %s914 = scalar_lea.vmem %s489, 8 [#allocation5]
        %915 = vst.msk [vmem:[%s914] sm:$0x3] %vm706, %v910
        %916 = vst.msk [vmem:[%s914 + $0x2] sm:$0x3] %vm706, %v911
        %917 = vst.msk [vmem:[%s914 + $0x4] sm:$0x3] %vm706, %v912
        %918 = vst.msk [vmem:[%s914 + $0x6] sm:$0x3] %vm706, %v913
        %s919 = sand.u32 %s149, 1
        %s920 = sand.u32 %s149, 1
        %s921 = smul.addr %s920, 16
        %s922 = scalar_lea.vmem [#allocation5], %s921
        // Predicated region
        $region164: #{full_rel_pos.1} parent=150 // pred_check
          %p923 = pneg %p159
        $region165: #{full_rel_pos.1} parent=150 // pred_check_branch
          %925 = sbr.rel (%p923) target = $region167
        $region166: #{full_rel_pos.1} parent=150 // pred_region
          %s926 = smul.addr %s16, 4
          %s927 = smul.addr %s926, 2
          %s928 = scalar_lea.vmem %s5, %s927
          // Predicated region
          $region168: #{full_rel_pos.1} parent=166 // pred_check
            _
          $region169: #{full_rel_pos.1} parent=166 // pred_check_branch
            %930 = sbr.rel (0) target = $region171
          $region170: #{full_rel_pos.1} parent=166 // pred_region
            // Predicated region
            $region172: #{full_rel_pos.1} parent=170 // pred_check
              _
            $region173: #{full_rel_pos.1} parent=170 // pred_check_branch
              %932 = sbr.rel target = $region175
            $region174: #{full_rel_pos.1} parent=170 // pred_region
              // Predicated region
              $region187: #{full_rel_pos.1} parent=174 // pred_check
                _
              $region188: #{full_rel_pos.1} parent=174 // pred_check_branch
                %962 = sbr.rel (0) target = $region190
              $region189: #{full_rel_pos.1} parent=174 // pred_region
                loop: start=0, step=1, limit=1
                $region191: #{full_rel_pos.1} parent=189 // loop_pre_header
                  _
                $region192: #{full_rel_pos.1} parent=189 // loop_header
                  %s964 = sphi 0, %s968
                  %p965 = scmp.ge.s32.totalorder %s964, 1
                  %s969 = sphi %s922, %s922
                  %s970 = sphi %s928, %s928
                $region193: #{full_rel_pos.1} parent=189 // loop_header_branch
                  %967 = sbr.rel (%p965) target = $region197
                $region194: #{full_rel_pos.1} parent=189 // loop_body
                  _
                $region195: #{full_rel_pos.1} parent=189 // loop_footer
                  %s968 = sadd.s32 1, %s964
                $region196: #{full_rel_pos.1} parent=189 // loop_footer_branch
                  %963 = sbr.rel target = $region192
                $region197: #{full_rel_pos.1} parent=189 // loop_exit
                  _
                %s972 = ssub.s32 4, 1
                loop: start=0, step=1, limit=1
                $region198: #{full_rel_pos.1} parent=189 // loop_pre_header
                  _
                $region199: #{full_rel_pos.1} parent=189 // loop_header
                  %s974 = sphi 0, %s978
                  %p975 = scmp.ge.s32.totalorder %s974, 1
                  %s979 = sphi %s922, %s922
                  %s980 = sphi %s928, %s928
                $region200: #{full_rel_pos.1} parent=189 // loop_header_branch
                  %977 = sbr.rel (%p975) target = $region204
                $region201: #{full_rel_pos.1} parent=189 // loop_body
                  %v981 = vld [vmem:[%s979] sm:%s972]
                  %982 = vst [vmem:[%s980] sm:%s972] %v981
                  %v983 = vld [vmem:[%s979 + $0x2] sm:%s972]
                  %984 = vst [vmem:[%s980 + $0x2] sm:%s972] %v983
                  %v985 = vld [vmem:[%s979 + $0x4] sm:%s972]
                  %986 = vst [vmem:[%s980 + $0x4] sm:%s972] %v985
                  %v987 = vld [vmem:[%s979 + $0x6] sm:%s972]
                  %988 = vst [vmem:[%s980 + $0x6] sm:%s972] %v987
                  %v989 = vld [vmem:[%s979 + $0x8] sm:%s972]
                  %990 = vst [vmem:[%s980 + $0x20] sm:%s972] %v989
                  %v991 = vld [vmem:[%s979 + $0xa] sm:%s972]
                  %992 = vst [vmem:[%s980 + $0x22] sm:%s972] %v991
                  %v993 = vld [vmem:[%s979 + $0xc] sm:%s972]
                  %994 = vst [vmem:[%s980 + $0x24] sm:%s972] %v993
                  %v995 = vld [vmem:[%s979 + $0xe] sm:%s972]
                  %996 = vst [vmem:[%s980 + $0x26] sm:%s972] %v995
                $region202: #{full_rel_pos.1} parent=189 // loop_footer
                  %s978 = sadd.s32 1, %s974
                $region203: #{full_rel_pos.1} parent=189 // loop_footer_branch
                  %973 = sbr.rel target = $region199
                $region204: #{full_rel_pos.1} parent=189 // loop_exit
                  _
              $region190: #{full_rel_pos.1} parent=174 // pred_fallthru
                _
            $region175: #{full_rel_pos.1} parent=170 // pred_fallthru
              _
            // Predicated region
            $region176: #{full_rel_pos.1} parent=170 // pred_check
              _
            $region177: #{full_rel_pos.1} parent=170 // pred_check_branch
              %934 = sbr.rel (0) target = $region179
            $region178: #{full_rel_pos.1} parent=170 // pred_region
              %s936 = ssub.s32 4, 1
              loop: start=0, step=1, limit=1
              $region180: #{full_rel_pos.1} parent=178 // loop_pre_header
                _
              $region181: #{full_rel_pos.1} parent=178 // loop_header
                %s938 = sphi 0, %s942
                %p939 = scmp.ge.s32.totalorder %s938, 1
                %s943 = sphi %s922, %s922
                %s944 = sphi %s928, %s928
              $region182: #{full_rel_pos.1} parent=178 // loop_header_branch
                %941 = sbr.rel (%p939) target = $region186
              $region183: #{full_rel_pos.1} parent=178 // loop_body
                %v945 = vld [vmem:[%s943] sm:%s936]
                %946 = vst [vmem:[%s944] sm:%s936] %v945
                %v947 = vld [vmem:[%s943 + $0x2] sm:%s936]
                %948 = vst [vmem:[%s944 + $0x2] sm:%s936] %v947
                %v949 = vld [vmem:[%s943 + $0x4] sm:%s936]
                %950 = vst [vmem:[%s944 + $0x4] sm:%s936] %v949
                %v951 = vld [vmem:[%s943 + $0x6] sm:%s936]
                %952 = vst [vmem:[%s944 + $0x6] sm:%s936] %v951
                %v953 = vld [vmem:[%s943 + $0x8] sm:%s936]
                %954 = vst [vmem:[%s944 + $0x20] sm:%s936] %v953
                %v955 = vld [vmem:[%s943 + $0xa] sm:%s936]
                %956 = vst [vmem:[%s944 + $0x22] sm:%s936] %v955
                %v957 = vld [vmem:[%s943 + $0xc] sm:%s936]
                %958 = vst [vmem:[%s944 + $0x24] sm:%s936] %v957
                %v959 = vld [vmem:[%s943 + $0xe] sm:%s936]
                %960 = vst [vmem:[%s944 + $0x26] sm:%s936] %v959
              $region184: #{full_rel_pos.1} parent=178 // loop_footer
                %s942 = sadd.s32 1, %s938
              $region185: #{full_rel_pos.1} parent=178 // loop_footer_branch
                %937 = sbr.rel target = $region181
              $region186: #{full_rel_pos.1} parent=178 // loop_exit
                _
            $region179: #{full_rel_pos.1} parent=170 // pred_fallthru
              _
          $region171: #{full_rel_pos.1} parent=166 // pred_fallthru
            _
          %997 = vnop
        $region167: #{full_rel_pos.1} parent=150 // pred_fallthru
          _
      $region151: #{full_rel_pos.1} parent=5 // pred_fallthru
        _
      %p998 = scmp.le.s32.totalorder 2, %s11
      // Predicated region
      $region205: #{full_rel_pos.1} parent=5 // pred_check
        %p999 = pneg %p998
      $region206: #{full_rel_pos.1} parent=5 // pred_check_branch
        %1001 = sbr.rel (%p999) target = $region208
      $region207: #{full_rel_pos.1} parent=5 // pred_region
        %s1002 = ssub.s32 %s11, 2
        // Predicated region
        $region209: #{full_rel_pos.1} parent=207 // pred_check
          %p1003 = pneg %p165
        $region210: #{full_rel_pos.1} parent=207 // pred_check_branch
          %1005 = sbr.rel (%p1003) target = $region212
        $region211: #{full_rel_pos.1} parent=207 // pred_region
          %s1006 = sand.u32 %s150, 1
          %s1007 = sand.u32 %s150, 1
          %s1008 = smul.addr %s1007, 16
          %s1009 = scalar_lea.vmem [#allocation5], %s1008
        $region212: #{full_rel_pos.1} parent=207 // pred_fallthru
          _
      $region208: #{full_rel_pos.1} parent=5 // pred_fallthru
        _
    $region6: #{full_rel_pos.1} parent=1 // loop_footer
      %s15 = sadd.s32 1, %s11
    $region7: #{full_rel_pos.1} parent=1 // loop_footer_branch
      %10 = sbr.rel target = $region3
    $region8: #{full_rel_pos.1} parent=1 // loop_exit
      _

</llo_original>
